<compile_context>
chip_gen: v6e
topology: v6e:2x2x1
jax: 0.10.0
libtpu: 0.0.40
codegen_flags: <defaults>
</compile_context>

<pallas_src>
import jax
import jax.numpy as jnp
from jax import lax
from jax.experimental import pallas as pl
from jax.experimental.pallas import tpu as pltpu

HEAD_PAD = 128  # lane-dense fused head output width (5 punc + 4 case + zero pad)


def _round_up(x, m):
    return ((x + m - 1) // m) * m


def _fused_kernel(ids_ref, embed_ref, w_ref, b_ref, out_ref, h_ref):
    # ids_ref:   (T_pad,)  int32 token ids, scalar-prefetched into SMEM
    # embed_ref: (V, H)    f32 embedding table, VMEM-resident (constant index_map)
    # w_ref:     (H, 128)  bf16 fused + zero-padded head weight (resident)
    # b_ref:     (1, 128)  f32 fused + zero-padded head bias (resident)
    # out_ref:   (tm, 128) bf16 lane-dense fused head output tile
    # h_ref:     (tm, H)   f32 scratch holding the gathered hidden rows
    tm = out_ref.shape[0]
    base = pl.program_id(0) * tm

    # Embedding row gather: O(tm * H) dynamic-slice copies driven by SMEM
    # scalars (replaces the former (tm, V) one-hot matmul gather).
    @pl.loop(0, tm)
    def _(r):
        tok = ids_ref[base + r]
        h_ref[pl.ds(r, 1), :] = embed_ref[pl.ds(tok, 1), :]

    h = h_ref[...]

    # GELU, tanh form (EUP slot). torch default is erf-based; difference at
    # these input magnitudes is < 1e-6.
    c = jnp.float32(0.7978845608028654)  # sqrt(2/pi)
    g = 0.5 * h * (1.0 + jnp.tanh(c * (h + 0.044715 * h * h * h)))

    # dropout(p=0.3) is identity in eval mode.

    # Single fused lane-dense head matmul: bf16 operands, f32 accumulate,
    # bias added in-kernel (free filler under MXU slack), bf16 store.
    acc = jnp.dot(g.astype(jnp.bfloat16), w_ref[...],
                  preferred_element_type=jnp.float32)
    out_ref[...] = (acc + b_ref[...]).astype(out_ref.dtype)


def recasepunc_fused(x_ids, embed, w_pad_bf16, b_pad, *, tm=1024):
    """x_ids: (B, S) int; embed: (V, H) f32; w_pad_bf16: (H,128) bf16; b_pad: (1,128) f32.

    Returns (punc (B,S,5) f32, case (B,S,4) f32).
    """
    B, S = x_ids.shape
    T = B * S
    V, H = embed.shape

    # Row tile: large to amortize per-grid-step overhead, but capped so the
    # grid has >= 2 steps whenever T spans more than one minimal tile (lets
    # the "parallel" row axis shard across both v7x TensorCores).
    tm_req = max(8, _round_up(tm, 8))
    half_rows = max(8, _round_up(pl.cdiv(T, 2), 8))
    tm_eff = min(tm_req, half_rows)
    T_pad = _round_up(T, tm_eff)

    ids_flat = x_ids.reshape(T).astype(jnp.int32)
    if T_pad != T:
        ids_flat = jnp.pad(ids_flat, (0, T_pad - T))  # padded rows sliced off below

    grid = (T_pad // tm_eff,)

    cost = pl.CostEstimate(
        flops=2 * T_pad * H * HEAD_PAD + 10 * T_pad * H,
        transcendentals=T_pad * H,
        bytes_accessed=(T_pad * 4              # ids
                        + V * H * 4            # embed table (resident)
                        + H * HEAD_PAD * 2     # fused weight (bf16, resident)
                        + HEAD_PAD * 4         # fused bias
                        + T_pad * HEAD_PAD * 2),  # bf16 output slab
    )

    out = pl.pallas_call(
        _fused_kernel,
        out_shape=jax.ShapeDtypeStruct((T_pad, HEAD_PAD), jnp.bfloat16),
        grid_spec=pltpu.PrefetchScalarGridSpec(
            num_scalar_prefetch=1,
            grid=grid,
            in_specs=[
                pl.BlockSpec((V, H), lambda i, ids: (0, 0)),         # embed (resident)
                pl.BlockSpec((H, HEAD_PAD), lambda i, ids: (0, 0)),  # fused weight
                pl.BlockSpec((1, HEAD_PAD), lambda i, ids: (0, 0)),  # fused bias
            ],
            out_specs=pl.BlockSpec((tm_eff, HEAD_PAD), lambda i, ids: (i, 0)),
            scratch_shapes=[pltpu.VMEM((tm_eff, H), jnp.float32)],
        ),
        compiler_params=pltpu.CompilerParams(
            dimension_semantics=("parallel",),
            # Safe on all generations for these shapes; re-derive when V/H grow
            # (v5e default 16 MiB, v6e/v7x 32 MiB, v7x physical cap 64 MiB).
            vmem_limit_bytes=32 * 1024 * 1024,
        ),
        cost_estimate=cost,
    )(ids_flat, embed, w_pad_bf16, b_pad)

    # Single slice of the slab (avoid re-reading the full (T_pad,128) twice),
    # then split / upcast the tiny (T, 9) logits.
    logits = out[:T, :9].astype(jnp.float32)
    punc = logits[:, :5].reshape(B, S, 5)
    case_logits = logits[:, 5:9].reshape(B, S, 4)
    return punc, case_logits


def model_forward(x_ids, params):
    """x_ids: (B, S) int32 token ids. Returns (punc (B,S,5), case (B,S,4))."""
    # Fuse both heads into one lane-dense (H, 128) weight + (1, 128) bias.
    w_cat = jnp.concatenate([params["w_punc"], params["w_case"]], axis=1)  # (H, 9)
    b_cat = jnp.concatenate([params["b_punc"], params["b_case"]], axis=1)  # (1, 9)
    w_pad = jnp.pad(w_cat, ((0, 0), (0, HEAD_PAD - w_cat.shape[1])))
    b_pad = jnp.pad(b_cat, ((0, 0), (0, HEAD_PAD - b_cat.shape[1])))
    return recasepunc_fused(x_ids, params["embed"],
                            w_pad.astype(jnp.bfloat16), b_pad)


def init_params(key, vocab=64, hidden=32):
    k_e, k_wp, k_bp, k_wc, k_bc = jax.random.split(key, 5)
    return {
        "embed": jax.random.normal(k_e, (vocab, hidden), jnp.float32) * 0.02,
        # stored transposed relative to torch nn.Linear ((out,in) -> (in,out))
        "w_punc": jax.random.normal(k_wp, (hidden, 5), jnp.float32) * 0.1,
        "b_punc": jax.random.normal(k_bp, (1, 5), jnp.float32) * 0.1,
        "w_case": jax.random.normal(k_wc, (hidden, 4), jnp.float32) * 0.1,
        "b_case": jax.random.normal(k_bc, (1, 4), jnp.float32) * 0.1,
    }


if __name__ == "__main__":
    key = jax.random.PRNGKey(0)
    k_params, k_ids = jax.random.split(key)

    B, S, H, VOCAB = 2, 8, 32, 64
    params = init_params(k_params, vocab=VOCAB, hidden=H)
    x_ids = jax.random.randint(k_ids, (B, S), 0, VOCAB, dtype=jnp.int32)

    punc, case_out = model_forward(x_ids, params)
    jax.block_until_ready((punc, case_out))

    # reference check in plain JAX (erf-based GELU, f32 throughout)
    h = jnp.take(params["embed"], x_ids, axis=0).reshape(B * S, H)
    g = jax.nn.gelu(h, approximate=False)
    punc_ref = (g @ params["w_punc"] + params["b_punc"]).reshape(B, S, 5)
    case_ref = (g @ params["w_case"] + params["b_case"]).reshape(B, S, 4)
    # tolerance covers bf16 MXU operands + bf16 output store
    assert jnp.allclose(punc, punc_ref, atol=5e-3, rtol=5e-2)
    assert jnp.allclose(case_out, case_ref, atol=5e-3, rtol=5e-2)

    print("KERNEL_OK")
</pallas_src>

<mosaic_0001>
module attributes {stable_mosaic.version = 11 : i64} {
  func.func @_fused_kernel(%arg0: i32, %arg1: memref<16xi32, #tpu.memory_space<smem>>, %arg2: memref<64x32xf32, #tpu.memory_space<vmem>>, %arg3: memref<32x128xbf16, #tpu.memory_space<vmem>>, %arg4: memref<1x128xf32, #tpu.memory_space<vmem>>, %arg5: memref<8x128xbf16, #tpu.memory_space<vmem>>, %arg6: memref<8x32xf32, #tpu.memory_space<vmem>>) attributes {dimension_semantics = [#tpu.dimension_semantics<parallel>], iteration_bounds = array<i64: 2>, scalar_prefetch = 1 : i64, scratch_operands = 1 : i64, tpu.core_type = #tpu.core_type<tc>, window_params = [{pipeline_mode = #tpu.pipeline_mode<synchronous>, transform_indices = @transform_0, window_bounds = array<i64: 64, 32>}, {pipeline_mode = #tpu.pipeline_mode<synchronous>, transform_indices = @transform_1, window_bounds = array<i64: 32, 128>}, {pipeline_mode = #tpu.pipeline_mode<synchronous>, transform_indices = @transform_2, window_bounds = array<i64: 1, 128>}, {transform_indices = @transform_3, window_bounds = array<i64: 8, 128>}]} {
    %c8_i32 = arith.constant 8 : i32
    %0 = arith.muli %arg0, %c8_i32 : i32
    %c0_i32 = arith.constant 0 : i32
    %c8_i32_0 = arith.constant 8 : i32
    %1 = arith.addi %c0_i32, %c8_i32_0 : i32
    %c1_i32 = arith.constant 1 : i32
    scf.for %arg7 = %c0_i32 to %1 step %c1_i32  : i32 {
      %c1_i32_13 = arith.constant 1 : i32
      %24 = arith.muli %arg7, %c1_i32_13 : i32
      %c0_i32_14 = arith.constant 0 : i32
      %25 = arith.addi %c0_i32_14, %24 : i32
      %26 = arith.addi %0, %25 : i32
      %27 = arith.index_cast %26 : i32 to index
      %28 = memref.load %arg1[%27] : memref<16xi32, #tpu.memory_space<smem>>
      %29 = arith.index_cast %28 : i32 to index
      %c0_15 = arith.constant 0 : index
      %30 = vector.load %arg2[%29, %c0_15] : memref<64x32xf32, #tpu.memory_space<vmem>>, vector<1x32xf32>
      %31 = arith.index_cast %25 : i32 to index
      %c0_16 = arith.constant 0 : index
      %32 = vector.load %arg6[%31, %c0_16] : memref<8x32xf32, #tpu.memory_space<vmem>>, vector<1x32xf32>
      tpu.vector_store %arg6[%31, %c0_16], %30 {strides = array<i32>} : memref<8x32xf32, #tpu.memory_space<vmem>>, vector<1x32xf32>,
    }
    %c8_i32_1 = arith.constant 8 : i32
    %c0 = arith.constant 0 : index
    %c0_2 = arith.constant 0 : index
    %2 = vector.load %arg6[%c0, %c0_2] : memref<8x32xf32, #tpu.memory_space<vmem>>, vector<8x32xf32>
    %cst = arith.constant 5.000000e-01 : f32
    %3 = vector.broadcast %cst : f32 to vector<8x32xf32>
    %4 = arith.mulf %3, %2 : vector<8x32xf32>
    %cst_3 = arith.constant 4.471500e-02 : f32
    %5 = vector.broadcast %cst_3 : f32 to vector<8x32xf32>
    %6 = arith.mulf %5, %2 : vector<8x32xf32>
    %7 = arith.mulf %6, %2 : vector<8x32xf32>
    %8 = arith.mulf %7, %2 : vector<8x32xf32>
    %9 = arith.addf %2, %8 : vector<8x32xf32>
    %cst_4 = arith.constant 0.797884583 : f32
    %10 = vector.broadcast %cst_4 : f32 to vector<8x32xf32>
    %11 = arith.mulf %10, %9 : vector<8x32xf32>
    %12 = math.tanh %11 : vector<8x32xf32>
    %cst_5 = arith.constant 1.000000e+00 : f32
    %13 = vector.broadcast %cst_5 : f32 to vector<8x32xf32>
    %14 = arith.addf %13, %12 : vector<8x32xf32>
    %15 = arith.mulf %4, %14 : vector<8x32xf32>
    %16 = arith.truncf %15 : vector<8x32xf32> to vector<8x32xbf16>
    %c0_6 = arith.constant 0 : index
    %c0_7 = arith.constant 0 : index
    %17 = vector.load %arg3[%c0_6, %c0_7] : memref<32x128xbf16, #tpu.memory_space<vmem>>, vector<32x128xbf16>
    %cst_8 = arith.constant dense<0.000000e+00> : vector<8x128xf32>
    %18 = tpu.matmul %16, %17, %cst_8 {dimension_numbers = #tpu.dot_dimension_numbers<[1], [0], [0], [1], [0, 0, 1, 1], [], []>} : vector<8x32xbf16>, vector<32x128xbf16>, vector<8x128xf32> -> vector<8x128xf32>
    %c0_9 = arith.constant 0 : index
    %c0_10 = arith.constant 0 : index
    %19 = vector.load %arg4[%c0_9, %c0_10] : memref<1x128xf32, #tpu.memory_space<vmem>>, vector<1x128xf32>
    %20 = vector.broadcast %19 : vector<1x128xf32> to vector<8x128xf32>
    %21 = arith.addf %18, %20 : vector<8x128xf32>
    %22 = arith.truncf %21 : vector<8x128xf32> to vector<8x128xbf16>
    %c0_11 = arith.constant 0 : index
    %c0_12 = arith.constant 0 : index
    %23 = vector.load %arg5[%c0_11, %c0_12] : memref<8x128xbf16, #tpu.memory_space<vmem>>, vector<8x128xbf16>
    tpu.vector_store %arg5[%c0_11, %c0_12], %22 {strides = array<i32>} : memref<8x128xbf16, #tpu.memory_space<vmem>>, vector<8x128xbf16>,
    return
  }
  func.func @transform_0(%arg0: i32, %arg1: memref<16xi32, #tpu.memory_space<smem>>) -> (i32, i32) {
    %c0_i32 = arith.constant 0 : i32
    %c0_i32_0 = arith.constant 0 : i32
    %c0_i32_1 = arith.constant 0 : i32
    return %c0_i32, %c0_i32_0 : i32, i32
  }
  func.func @transform_1(%arg0: i32, %arg1: memref<16xi32, #tpu.memory_space<smem>>) -> (i32, i32) {
    %c0_i32 = arith.constant 0 : i32
    %c0_i32_0 = arith.constant 0 : i32
    %c0_i32_1 = arith.constant 0 : i32
    return %c0_i32, %c0_i32_0 : i32, i32
  }
  func.func @transform_2(%arg0: i32, %arg1: memref<16xi32, #tpu.memory_space<smem>>) -> (i32, i32) {
    %c0_i32 = arith.constant 0 : i32
    %c0_i32_0 = arith.constant 0 : i32
    %c0_i32_1 = arith.constant 0 : i32
    return %c0_i32, %c0_i32_0 : i32, i32
  }
  func.func @transform_3(%arg0: i32, %arg1: memref<16xi32, #tpu.memory_space<smem>>) -> (i32, i32) {
    %c0_i32 = arith.constant 0 : i32
    %c0_i32_0 = arith.constant 0 : i32
    return %arg0, %c0_i32 : i32, i32
  }
}

</mosaic_0001>

<llo_original>
// kernel: tpu_custom_call.1
$region0: #{tpu_custom_call.1}
  #allocation0 [shape = 'u32[]', space=smem, size = 0x4, offset = 0x4, fixed_abs, tag = 'smem constant byte address 0x4 - core index']
  #allocation1 [shape = 'u32[144,128]{1,0:T(1,128)}', space=vmem, size = 0x12000, scoped, tag = 'internal scratch']
  #allocation2 [shape = 'f32[8,32]{1,0:T(8,128)}', space=vmem, size = 0x1000, scoped, tag = 'scratch operand']
  #allocation3 [shape = 's32[1]{0}', space=sflag, size = 0x4, scoped, tag = 'scoped memory for tpu_custom_call.1']
  #allocation4 [shape = 'u8[512]{0}', space=smem, size = 0x200, scoped, tag = 'prefetched SMEM operand 0']
  %s0 = inlined_call_operand.vmem [shape: s32[16], index: 0, kind: input, shape index: {}]
  %s1 = inlined_call_operand.vmem [shape: f32[64,32], index: 1, kind: input, shape index: {}]
  %s2 = inlined_call_operand.vmem [shape: bf16[32,128], index: 2, kind: input, shape index: {}]
  %s3 = inlined_call_operand.vmem [shape: f32[1,128], index: 3, kind: input, shape index: {}]
  %s4 = inlined_call_operand.hbm [shape: bf16[16,128], index: 4, kind: output, shape index: {}]
  %s5 = sld [smem:[#allocation0]]
  $region52: #{tpu_custom_call.1} parent=0
    _
  %s7 = ssub.s32 1, %s5
  %s8 = scalar_select 0, %s7, %s5
  %s9 = sshll.u32 %s0, 4
  %s10 = int_to_ptr.vmem [resolvable:$true] %s9
  %12 = dma.vmem_to_smem %s10, 16, [#allocation4], [#allocation3]
  %13 = dma.done [#allocation3], 16
  %14 = sfence
  $region1: #{tpu_custom_call.1} parent=0
    #allocation5 [shape = 'u8[4096]{0}', space=vmem, size = 0x1000, scoped, tag = 'output window, operand 0']
    #allocation6 [shape = 's32[2]{0}', space=sflag, size = 0x8, scoped, tag = 'scoped memory for tpu_custom_call.1']
    %15 = vsyncpa [#allocation6], 0
    %s16 = scalar_lea.sflag [#allocation6], 1
    %17 = vsyncpa %s16, 0
    loop: start=0, step=1, limit=4
    $region2: #{tpu_custom_call.1} parent=1 // loop_pre_header
      _
    $region3: #{tpu_custom_call.1} parent=1 // loop_header
      %s19 = sphi 0, %s23
      %p20 = scmp.ge.s32.totalorder %s19, 4
      %s27 = sphi 0, %s27
      %s29 = sphi 0, %s27
      %s30 = sphi 0, %s29
      %s44 = sphi 0, %s30
      %s48 = sphi 0, %s48
      %s50 = sphi 0, %s48
      %s51 = sphi 0, %s50
      %s65 = sphi 0, %s51
      %s69 = sphi 0, %s69
      %s71 = sphi 0, %s69
      %s72 = sphi 0, %s71
      %s86 = sphi 0, %s72
      %s92 = sphi 0, %s94
      %s95 = sphi 0, %s92
      %s96 = sphi 0, %s95
      %s112 = sphi 0, %s96
    $region4: #{tpu_custom_call.1} parent=1 // loop_header_branch
      %22 = sbr.rel (%p20) target = $region8
    $region5: #{tpu_custom_call.1} parent=1 // loop_body
      %s24 = ssub.s32 %s19, 1
      %s25 = ssub.s32 %s19, 2
      %s26 = sadd.s32 %s19, 1
      %s28 = sadd.s32 %s27, 1
      %p31 = scmp.eq.s32.totalorder %s19, 1
      %p32 = scmp.ne.s32.totalorder %s27, %s29
      %p33 = scmp.eq.s32.totalorder %s19, 0
      %p34 = por %p32, %p33
      %p35 = scmp.ne.s32.totalorder %s27, %s29
      %p36 = scmp.eq.s32.totalorder %s24, 1
      %p37 = por %p35, %p36
      %p38 = scmp.ne.s32.totalorder %s29, %s30
      %p39 = scmp.eq.s32.totalorder %s24, 0
      %p40 = por %p38, %p39
      %p41 = scmp.ne.s32.totalorder %s29, %s30
      %p42 = scmp.eq.s32.totalorder %s25, 1
      %p43 = por %p41, %p42
      %p45 = scmp.ne.s32.totalorder %s30, %s44
      %p46 = scmp.eq.s32.totalorder %s25, 0
      %p47 = por %p45, %p46
      %s49 = sadd.s32 %s48, 1
      %p52 = scmp.eq.s32.totalorder %s19, 1
      %p53 = scmp.ne.s32.totalorder %s48, %s50
      %p54 = scmp.eq.s32.totalorder %s19, 0
      %p55 = por %p53, %p54
      %p56 = scmp.ne.s32.totalorder %s48, %s50
      %p57 = scmp.eq.s32.totalorder %s24, 1
      %p58 = por %p56, %p57
      %p59 = scmp.ne.s32.totalorder %s50, %s51
      %p60 = scmp.eq.s32.totalorder %s24, 0
      %p61 = por %p59, %p60
      %p62 = scmp.ne.s32.totalorder %s50, %s51
      %p63 = scmp.eq.s32.totalorder %s25, 1
      %p64 = por %p62, %p63
      %p66 = scmp.ne.s32.totalorder %s51, %s65
      %p67 = scmp.eq.s32.totalorder %s25, 0
      %p68 = por %p66, %p67
      %s70 = sadd.s32 %s69, 1
      %p73 = scmp.eq.s32.totalorder %s19, 1
      %p74 = scmp.ne.s32.totalorder %s69, %s71
      %p75 = scmp.eq.s32.totalorder %s19, 0
      %p76 = por %p74, %p75
      %p77 = scmp.ne.s32.totalorder %s69, %s71
      %p78 = scmp.eq.s32.totalorder %s24, 1
      %p79 = por %p77, %p78
      %p80 = scmp.ne.s32.totalorder %s71, %s72
      %p81 = scmp.eq.s32.totalorder %s24, 0
      %p82 = por %p80, %p81
      %p83 = scmp.ne.s32.totalorder %s71, %s72
      %p84 = scmp.eq.s32.totalorder %s25, 1
      %p85 = por %p83, %p84
      %p87 = scmp.ne.s32.totalorder %s72, %s86
      %p88 = scmp.eq.s32.totalorder %s25, 0
      %p89 = por %p87, %p88
      %s90 = ssub.s32 %s19, %s26
      %p91 = scmp.eq.s32.totalorder %s90, 0
      %s93 = sadd.s32 %s92, 1
      %s94 = scalar_select %p91, %s92, %s93
      %p97 = pneg %p91
      %p98 = scmp.eq.s32.totalorder %s19, 1
      %p99 = por %p97, %p98
      %p100 = scmp.ne.s32.totalorder %s92, %s95
      %p101 = scmp.eq.s32.totalorder %s19, 0
      %p102 = por %p100, %p101
      %p103 = scmp.ne.s32.totalorder %s92, %s95
      %p104 = scmp.eq.s32.totalorder %s24, 1
      %p105 = por %p103, %p104
      %p106 = scmp.ne.s32.totalorder %s95, %s96
      %p107 = scmp.eq.s32.totalorder %s24, 0
      %p108 = por %p106, %p107
      %p109 = scmp.ne.s32.totalorder %s95, %s96
      %p110 = scmp.eq.s32.totalorder %s25, 1
      %p111 = por %p109, %p110
      %p113 = scmp.ne.s32.totalorder %s96, %s112
      %p114 = scmp.eq.s32.totalorder %s25, 0
      %p115 = por %p113, %p114
      %p116 = scmp.le.s32.totalorder 1, %s19
      %p117 = scmp.lt.s32.totalorder %s19, 3
      %p118 = pnand %p116, %p117
      %p119 = pneg %p118
      // Predicated region
      $region9: #{tpu_custom_call.1} parent=5 // pred_check
        _
      $region10: #{tpu_custom_call.1} parent=5 // pred_check_branch
        %121 = sbr.rel (%p118) target = $region12
      $region11: #{tpu_custom_call.1} parent=5 // pred_region
        %s122 = ssub.s32 %s19, 1
        // Predicated region
        $region13: #{tpu_custom_call.1} parent=11 // pred_check
          %p123 = pneg %p40
        $region14: #{tpu_custom_call.1} parent=11 // pred_check_branch
          %125 = sbr.rel (%p123) target = $region16
        $region15: #{tpu_custom_call.1} parent=11 // pred_region
          _
        $region16: #{tpu_custom_call.1} parent=11 // pred_fallthru
          _
        // Predicated region
        $region17: #{tpu_custom_call.1} parent=11 // pred_check
          %p126 = pneg %p61
        $region18: #{tpu_custom_call.1} parent=11 // pred_check_branch
          %128 = sbr.rel (%p126) target = $region20
        $region19: #{tpu_custom_call.1} parent=11 // pred_region
          _
        $region20: #{tpu_custom_call.1} parent=11 // pred_fallthru
          _
        // Predicated region
        $region21: #{tpu_custom_call.1} parent=11 // pred_check
          %p129 = pneg %p82
        $region22: #{tpu_custom_call.1} parent=11 // pred_check_branch
          %131 = sbr.rel (%p129) target = $region24
        $region23: #{tpu_custom_call.1} parent=11 // pred_region
          _
        $region24: #{tpu_custom_call.1} parent=11 // pred_fallthru
          _
      $region12: #{tpu_custom_call.1} parent=5 // pred_fallthru
        _
      %p132 = scmp.lt.s32.totalorder %s19, 2
      // Predicated region
      $region25: #{tpu_custom_call.1} parent=5 // pred_check
        %p133 = pneg %p132
      $region26: #{tpu_custom_call.1} parent=5 // pred_check_branch
        %135 = sbr.rel (%p133) target = $region28
      $region27: #{tpu_custom_call.1} parent=5 // pred_region
        _
      $region28: #{tpu_custom_call.1} parent=5 // pred_fallthru
        _
      %p136 = scmp.le.s32.totalorder 1, %s19
      %p137 = scmp.lt.s32.totalorder %s19, 3
      %p138 = pnand %p136, %p137
      %p139 = pneg %p138
      // Predicated region
      $region29: #{tpu_custom_call.1} parent=5 // pred_check
        _
      $region30: #{tpu_custom_call.1} parent=5 // pred_check_branch
        %141 = sbr.rel (%p138) target = $region32
      $region31: #{tpu_custom_call.1} parent=5 // pred_region
        %s142 = ssub.s32 %s19, 1
        %p143 = pneg %p40
        %p144 = pneg %p37
        %p145 = pneg %p61
        %p146 = pneg %p58
        %p147 = pneg %p82
        %p148 = pneg %p79
        %p149 = pneg %p108
        %p150 = pneg %p105
        %s151 = sand.u32 %s95, 1
        %s152 = scalar_lea.sflag [#allocation6], %s151
        %s153 = sand.u32 %s95, 1
        %s154 = smul.addr %s153, 4
        %s155 = scalar_lea.vmem [#allocation5], %s154
        %s157 = smul.u32 %s24, 8
        loop: start=0, step=1, limit=8
        $region33: #{tpu_custom_call.1} parent=31 // loop_pre_header
          _
        $region34: #{tpu_custom_call.1} parent=31 // loop_header
          %s159 = sphi 0, %s163
          %p160 = scmp.ge.s32.totalorder %s159, 8
        $region35: #{tpu_custom_call.1} parent=31 // loop_header_branch
          %162 = sbr.rel (%p160) target = $region39
        $region36: #{tpu_custom_call.1} parent=31 // loop_body
          %s164 = sadd.s32 %s157, %s159
          %s165 = sld [smem:[#allocation4 + %s164]]
          %s166 = scalar_lea.vmem %s1, %s165
          %v167 = vld [vmem:[%s166] sm:$0x1]
          %s168 = scalar_lea.vmem [#allocation2], %s159
          %vm169 = vcmask 253952
          %170 = vst.msk [vmem:[%s168] sm:$0x1] %vm169, %v167
        $region37: #{tpu_custom_call.1} parent=31 // loop_footer
          %s163 = sadd.s32 1, %s159
        $region38: #{tpu_custom_call.1} parent=31 // loop_footer_branch
          %158 = sbr.rel target = $region34
        $region39: #{tpu_custom_call.1} parent=31 // loop_exit
          _
        %v171 = vld [vmem:[#allocation2] sm:$0xff]
        %v172 = vmul.f32 %v171, 0.5
        %v173 = vmul.f32 %v171, 0.044715
        %v174 = vmul.f32 %v173, %v171
        %v175 = vmul.f32 %v174, %v171
        %v176 = vadd.f32 %v171, %v175
        %v177 = vmul.f32 %v176, 0.7978846
        %v178 = vtanh.pop %v177
        %v179 = vadd.f32 %v178, 1.0
        %v180 = vmul.f32 %v172, %v179
        %v181 = vpack.c.bf16 %v180, %v180
        %v182 = vld [vmem:[%s2] sm:$0xf]
        %v183 = vld [vmem:[%s2 + $0x4] sm:$0xf]
        %v184 = vld [vmem:[%s2 + $0x8] sm:$0xf]
        %v185 = vld [vmem:[%s2 + $0xc] sm:$0xf]
        %v186 = vld [vmem:[%s3] sm:$0x1]
        %v188 = vlaneseq
        %v189 = vshrl.u32 %v188, 7
        %v190 = vsub.s32 0, %v189
        %v191 = vrot.slane %v186, %v190
        %v197 = vunpack.c.l.b16 %v182
        %v198 = vunpack.c.l.b16 %v183
        %v199 = vunpack.c.l.b16 %v184
        %v200 = vunpack.c.l.b16 %v185
        %v201 = vpack.c.b16 %v198, %v197
        %v202 = vpack.c.b16 %v200, %v199
        %vm205 = vcmask 261120
        %v207 = vsel %vm205, %v181, 0
        %209 = vmatprep.subr.bf16.mxu0 0
        %210 = vmatpush1.bf16.msra.mxu0 0
        %211 = vmatprep.subr.bf16.mxu0 0
        %212 = vmatpush1.bf16.msra.mxu0 0
        %213 = vmatprep.subr.bf16.mxu0 0
        %214 = vmatpush1.bf16.msra.mxu0 0
        %215 = vmatprep.subr.bf16.mxu0 0
        %216 = vmatpush1.bf16.msra.mxu0 0
        %217 = vmatprep.subr.bf16.mxu0 0
        %218 = vmatpush1.bf16.msra.mxu0 0
        %219 = vmatprep.subr.bf16.mxu0 0
        %220 = vmatpush1.bf16.msra.mxu0 0
        %221 = vmatprep.subr.bf16.mxu0 0
        %222 = vmatpush1.bf16.msra.mxu0 %v202
        %223 = vmatprep.subr.bf16.mxu0 0
        %224 = vmatpush1.bf16.msra.mxu0 %v201
        %225 = vmatprep.subr.bf16.mxu0 0
        %226 = vmatpush2.bf16.msra.mxu0 0
        %227 = vmatprep.subr.bf16.mxu0 0
        %228 = vmatpush2.bf16.msra.mxu0 0
        %229 = vmatprep.subr.bf16.mxu0 0
        %230 = vmatpush2.bf16.msra.mxu0 0
        %231 = vmatprep.subr.bf16.mxu0 0
        %232 = vmatpush2.bf16.msra.mxu0 0
        %233 = vmatprep.subr.bf16.mxu0 0
        %234 = vmatpush2.bf16.msra.mxu0 0
        %235 = vmatprep.subr.bf16.mxu0 0
        %236 = vmatpush2.bf16.msra.mxu0 0
        %237 = vmatprep.subr.bf16.mxu0 0
        %238 = vmatpush2.bf16.msra.mxu0 0
        %239 = vmatprep.subr.bf16.mxu0 0
        %240 = vmatpush2.bf16.msra.mxu0 0
        %241 = vmatprep.mubr.bf16.mxu0 0
        %242 = vmatmul.mubr.bf16.gmra.mxu0 %v207
        %v243 = vpop.f32.mrf.mxu0
        %v244 = vadd.f32 %v191, %v243
        %v245 = vpop.f32.mrf.mxu0
        %v246 = vpop.f32.mrf.mxu0
        %v247 = vpop.f32.mrf.mxu0
        %248 = vdwg.mxu0
        %v249 = vpack.c.bf16 %v244, %v244
        %250 = vst [vmem:[%s155] sm:$0xf] %v249
        %s251 = sand.u32 %s95, 1
        %s252 = scalar_lea.sflag [#allocation6], %s251
        %s253 = sand.u32 %s95, 1
        %s254 = smul.addr %s253, 4
        %s255 = scalar_lea.vmem [#allocation5], %s254
        // Predicated region
        $region40: #{tpu_custom_call.1} parent=31 // pred_check
          %p256 = pneg %p105
        $region41: #{tpu_custom_call.1} parent=31 // pred_check_branch
          %258 = sbr.rel (%p256) target = $region43
        $region42: #{tpu_custom_call.1} parent=31 // pred_region
          %s260 = ssub.s32 64, 64
          %261 = vsyncadd %s252, %s260
          %s262 = smul.addr %s24, 64
          %s263 = scalar_lea.hbm %s4, %s262
          %s265 = sshll.u32 %s255, 4
          %s266 = int_to_ptr.vmem [resolvable:$true] %s265
          %268 = dma.vmem_to_hbm [thread:$0]  %s266, 64, %s263, %s252
        $region43: #{tpu_custom_call.1} parent=31 // pred_fallthru
          _
      $region32: #{tpu_custom_call.1} parent=5 // pred_fallthru
        _
      %p269 = scmp.le.s32.totalorder 2, %s19
      // Predicated region
      $region44: #{tpu_custom_call.1} parent=5 // pred_check
        %p270 = pneg %p269
      $region45: #{tpu_custom_call.1} parent=5 // pred_check_branch
        %272 = sbr.rel (%p270) target = $region47
      $region46: #{tpu_custom_call.1} parent=5 // pred_region
        %s273 = ssub.s32 %s19, 2
        // Predicated region
        $region48: #{tpu_custom_call.1} parent=46 // pred_check
          %p274 = pneg %p111
        $region49: #{tpu_custom_call.1} parent=46 // pred_check_branch
          %276 = sbr.rel (%p274) target = $region51
        $region50: #{tpu_custom_call.1} parent=46 // pred_region
          %s277 = sand.u32 %s96, 1
          %s278 = scalar_lea.sflag [#allocation6], %s277
          %s279 = sand.u32 %s96, 1
          %s280 = smul.addr %s279, 4
          %s281 = scalar_lea.vmem [#allocation5], %s280
          %282 = dma.done %s278, 64
        $region51: #{tpu_custom_call.1} parent=46 // pred_fallthru
          _
      $region47: #{tpu_custom_call.1} parent=5 // pred_fallthru
        _
    $region6: #{tpu_custom_call.1} parent=1 // loop_footer
      %s23 = sadd.s32 1, %s19
    $region7: #{tpu_custom_call.1} parent=1 // loop_footer_branch
      %18 = sbr.rel target = $region3
    $region8: #{tpu_custom_call.1} parent=1 // loop_exit
      _
    %283 = vsyncpa [#allocation6], 1
    %s284 = scalar_lea.sflag [#allocation6], 1
    %285 = vsyncpa %s284, 1

</llo_original>
